<compile_context>
chip_gen: v5e
topology: v5e:2x2
jax: 0.10.0
libtpu: 0.0.40
codegen_flags: <defaults>
</compile_context>

<pallas_src>
import jax
import jax.numpy as jnp
from jax.experimental import pallas as pl
from jax.experimental.pallas import tpu as pltpu


def _round_up(x, m):
    return (x + m - 1) // m * m


def _cdiv(a, b):
    return -(-a // b)


def _gen_tile_defaults():
    """Generation-aware default tile sizes (fit the default scoped VMEM)."""
    try:
        kind = jax.devices()[0].device_kind.lower()
    except Exception:
        kind = ""
    if "v6" in kind:
        # v6e: 918 TF/s vs ~1.4 TB/s -> needs the most arithmetic intensity.
        # ~20 MiB double-buffered working set, under the 32 MiB default scope.
        return dict(tile_m=1024, tile_n=1024, tile_k=1024, buffers=2)
    if "v7" in kind:
        # v7x: 3.2 TB/s HBM, 64 MiB physical VMEM; ~12 MiB working set leaves
        # headroom for 3-deep input buffering.
        return dict(tile_m=512, tile_n=1024, tile_k=1024, buffers=3)
    # v5e and fallback: stay under the 16 MiB default scoped VMEM.
    return dict(tile_m=512, tile_n=512, tile_k=1024, buffers=2)


def _choose_k(D, tile_k):
    """K tile + padded K so the reduction grid is never ragged."""
    if D <= tile_k:
        return D, D                      # single K block == full dim, no pad
    gk = _cdiv(D, tile_k)
    tk = _round_up(_cdiv(D, gk), 128)    # balanced, lane-aligned
    return tk, gk * tk


def _choose_m(B, tile_m):
    """M tile that minimizes wasted work (balanced cdiv, 16-aligned)."""
    if B <= tile_m:
        return B                         # one M block equal to the full batch
    gm = _cdiv(B, tile_m)
    return _round_up(_cdiv(B, gm), 16)


def prepare_encoder_params(w, b, *, tile_k=None):
    """One-time weight prep, hoisted out of the per-call path.

    w: [D, H] f32, b: [H] or [1, H].  Returns bf16 (K-padded) W, f32 bias row,
    and the K tiling it was prepared for.
    """
    if tile_k is None:
        tile_k = _gen_tile_defaults()["tile_k"]
    D, H = w.shape
    tk, Kp = _choose_k(D, tile_k)
    w_c = w.astype(jnp.bfloat16)
    if Kp != D:
        w_c = jnp.pad(w_c, ((0, Kp - D), (0, 0)))
    b_c = jnp.reshape(b, (1, H)).astype(jnp.float32)
    return dict(w=w_c, b=b_c, D=D, H=H, tk=tk, Kp=Kp)


def _linear_kernel(x_ref, w_ref, b_ref, o_ref, acc_ref):
    """One grid step: acc[tm, tn] = bias + sum_k x[tm, tk] @ w[tk, tn]."""
    k = pl.program_id(2)
    # MXU-native bf16 operands, f32 accumulation.  The astype is a no-op when
    # the wrapper already streamed x as bf16.
    p = jnp.dot(x_ref[...].astype(jnp.bfloat16), w_ref[...],
                preferred_element_type=jnp.float32)

    @pl.when(k == 0)
    def _():
        # Store-only init: bias folded in, no accumulator read at k == 0.
        acc_ref[...] = p + b_ref[...]

    @pl.when(k != 0)
    def _():
        acc_ref[...] += p

    @pl.when(k == pl.num_programs(2) - 1)
    def _():
        o_ref[...] = acc_ref[...].astype(o_ref.dtype)


def base_sender_forward(x, params, *, tile_m=None, tile_n=None, buffers=None):
    """encoder(x) = x @ W + b using prepared (bf16, K-padded) weights."""
    defaults = _gen_tile_defaults()
    tile_m = defaults["tile_m"] if tile_m is None else tile_m
    tile_n = defaults["tile_n"] if tile_n is None else tile_n
    buffers = defaults["buffers"] if buffers is None else buffers

    w_c, b_c = params["w"], params["b"]
    D, H, tk, Kp = params["D"], params["H"], params["tk"], params["Kp"]

    lead = x.shape[:-1]
    x2 = x if x.ndim == 2 else x.reshape(-1, D)
    B = x2.shape[0]
    assert x2.shape[1] == D
    out_dtype = x.dtype

    tm = _choose_m(B, tile_m)
    tn = min(_round_up(H, 128), tile_n)
    grid = (_cdiv(B, tm), _cdiv(H, tn), Kp // tk)

    # Pre-cast x to bf16 only when the bf16 copy is re-read enough times
    # (N-grid > 2) to amortize the extra HBM pass.
    precast = grid[1] > 2 and jnp.dtype(x2.dtype).itemsize > 2
    x_c = x2.astype(jnp.bfloat16) if precast else x2
    if Kp != D:
        # K must be zero-padded: ragged K would contaminate valid outputs,
        # unlike ragged M/N whose effects land only in masked-out writes.
        x_c = jnp.pad(x_c, ((0, 0), (0, Kp - D)))

    x_item = jnp.dtype(x_c.dtype).itemsize
    out_item = jnp.dtype(out_dtype).itemsize

    # Advisory cost estimate, with tile re-streaming accounted for.
    cost = pl.CostEstimate(
        flops=2 * (grid[0] * tm) * Kp * (grid[1] * tn),
        transcendentals=0,
        bytes_accessed=int(
            grid[1] * (grid[0] * tm) * Kp * x_item      # x streamed per N tile
            + grid[0] * Kp * (grid[1] * tn) * 2         # w streamed per M tile
            + B * H * out_item                          # output, written once
            + grid[0] * H * 4                           # bias
        ),
    )

    # Raise the scoped-VMEM limit only if the working set needs it.
    in_bufs = max(2, buffers)
    est = (in_bufs * (tm * tk * x_item + tk * tn * 2 + tn * 4)
           + 2 * tm * tn * out_item + tm * tn * 4)
    vmem_limit = None
    if est > 28 * 1024 * 1024:
        vmem_limit = min(int(est * 3 // 2), 96 * 1024 * 1024)

    def in_spec(block, index_map):
        if buffers and buffers > 2 and hasattr(pl, "Buffered"):
            try:
                return pl.BlockSpec(block, index_map,
                                    pipeline_mode=pl.Buffered(buffers))
            except TypeError:   # older jax without pipeline_mode kwarg
                pass
        return pl.BlockSpec(block, index_map)

    out = pl.pallas_call(
        _linear_kernel,
        out_shape=jax.ShapeDtypeStruct((B, H), out_dtype),
        grid_spec=pltpu.PrefetchScalarGridSpec(
            num_scalar_prefetch=0,
            grid=grid,
            in_specs=[
                in_spec((tm, tk), lambda i, j, k: (i, k)),       # x tile
                in_spec((tk, tn), lambda i, j, k: (k, j)),       # w tile
                pl.BlockSpec((1, tn), lambda i, j, k: (0, j)),   # bias tile
            ],
            out_specs=pl.BlockSpec((tm, tn), lambda i, j, k: (i, j)),
            scratch_shapes=[pltpu.VMEM((tm, tn), jnp.float32)],
        ),
        compiler_params=pltpu.CompilerParams(
            dimension_semantics=("parallel", "parallel", "arbitrary"),
            vmem_limit_bytes=vmem_limit,
        ),
        cost_estimate=cost,
    )(x_c, w_c, b_c)

    return out if x.ndim == 2 else out.reshape(*lead, H)


class BaseSenderPallas:
    """Pallas stand-in for BaseSender with a Linear(in_features, hidden_dim)
    encoder; weight prep (bf16 cast / padding) is done once at init."""

    def __init__(self, in_features, hidden_dim=256, key=None):
        key = jax.random.PRNGKey(0) if key is None else key
        # Deterministic kaiming-normal-style init (matches weight_init intent).
        w = jax.random.normal(key, (in_features, hidden_dim), jnp.float32)
        w = w * jnp.sqrt(2.0 / in_features)
        b = jnp.zeros((hidden_dim,), jnp.float32)
        self.hidden_dim = hidden_dim
        self.params = prepare_encoder_params(w, b)
        self._w_f32, self._b_f32 = w, b   # kept only for the reference check

    def __call__(self, x):
        return base_sender_forward(x, self.params)


if __name__ == "__main__":
    # Small shapes consistent with the module: hidden_dim=256 (module default),
    # batch=8, in_features=128.  (At these toy sizes Pallas adds no value over
    # XLA — the tiling is shaped for production B/D/H — but it runs correctly.)
    B, D, H = 8, 128, 256

    key = jax.random.PRNGKey(0)
    kx, kw = jax.random.split(key, 2)

    sender = BaseSenderPallas(in_features=D, hidden_dim=H, key=kw)
    x = jax.random.normal(kx, (B, D), dtype=jnp.float32)

    out = sender(x)
    out = jax.block_until_ready(out)

    # Reference check in plain JAX (f32 reference; tolerance covers the bf16
    # operand cast — accumulation is f32 on both sides).
    ref = x @ sender._w_f32 + sender._b_f32
    assert out.shape == (B, H)
    assert jnp.allclose(out, ref, atol=5e-2, rtol=5e-2), (
        float(jnp.max(jnp.abs(out - ref)))
    )

    print("KERNEL_OK")
</pallas_src>

<mosaic_0001>
module attributes {stable_mosaic.version = 11 : i64} {
  func.func @_linear_kernel(%arg0: i32, %arg1: i32, %arg2: i32, %arg3: memref<8x128xf32, #tpu.memory_space<vmem>>, %arg4: memref<128x256xbf16, #tpu.memory_space<vmem>>, %arg5: memref<1x256xf32, #tpu.memory_space<vmem>>, %arg6: memref<8x256xf32, #tpu.memory_space<vmem>>, %arg7: memref<8x256xf32, #tpu.memory_space<vmem>>) attributes {dimension_semantics = [#tpu.dimension_semantics<parallel>, #tpu.dimension_semantics<parallel>, #tpu.dimension_semantics<arbitrary>], iteration_bounds = array<i64: 1, 1, 1>, scalar_prefetch = 0 : i64, scratch_operands = 1 : i64, tpu.core_type = #tpu.core_type<tc>, window_params = [{transform_indices = @transform_0, window_bounds = array<i64: 8, 128>}, {transform_indices = @transform_1, window_bounds = array<i64: 128, 256>}, {transform_indices = @transform_2, window_bounds = array<i64: 1, 256>}, {transform_indices = @transform_3, window_bounds = array<i64: 8, 256>}]} {
    %c0 = arith.constant 0 : index
    %c0_0 = arith.constant 0 : index
    %0 = vector.load %arg3[%c0, %c0_0] : memref<8x128xf32, #tpu.memory_space<vmem>>, vector<8x128xf32>
    %1 = arith.truncf %0 : vector<8x128xf32> to vector<8x128xbf16>
    %c0_1 = arith.constant 0 : index
    %c0_2 = arith.constant 0 : index
    %2 = vector.load %arg4[%c0_1, %c0_2] : memref<128x256xbf16, #tpu.memory_space<vmem>>, vector<128x256xbf16>
    %cst = arith.constant dense<0.000000e+00> : vector<8x256xf32>
    %3 = tpu.matmul %1, %2, %cst {dimension_numbers = #tpu.dot_dimension_numbers<[1], [0], [0], [1], [0, 0, 1, 1], [], []>} : vector<8x128xbf16>, vector<128x256xbf16>, vector<8x256xf32> -> vector<8x256xf32>
    %c0_i32 = arith.constant 0 : i32
    %4 = arith.cmpi eq, %arg2, %c0_i32 : i32
    %5 = arith.extui %4 : i1 to i32
    %c0_i32_3 = arith.constant 0 : i32
    %6 = arith.cmpi ne, %5, %c0_i32_3 : i32
    scf.if %6 {
      %c0_8 = arith.constant 0 : index
      %c0_9 = arith.constant 0 : index
      %13 = vector.load %arg5[%c0_8, %c0_9] : memref<1x256xf32, #tpu.memory_space<vmem>>, vector<1x256xf32>
      %14 = vector.broadcast %13 : vector<1x256xf32> to vector<8x256xf32>
      %15 = arith.addf %3, %14 : vector<8x256xf32>
      %c0_10 = arith.constant 0 : index
      %c0_11 = arith.constant 0 : index
      %16 = vector.load %arg7[%c0_10, %c0_11] : memref<8x256xf32, #tpu.memory_space<vmem>>, vector<8x256xf32>
      tpu.vector_store %arg7[%c0_10, %c0_11], %15 {strides = array<i32>} : memref<8x256xf32, #tpu.memory_space<vmem>>, vector<8x256xf32>,
    } else {
    }
    %c0_i32_4 = arith.constant 0 : i32
    %7 = arith.cmpi ne, %arg2, %c0_i32_4 : i32
    %8 = arith.extui %7 : i1 to i32
    %c0_i32_5 = arith.constant 0 : i32
    %9 = arith.cmpi ne, %8, %c0_i32_5 : i32
    scf.if %9 {
      %c0_8 = arith.constant 0 : index
      %c0_9 = arith.constant 0 : index
      %13 = vector.load %arg7[%c0_8, %c0_9] : memref<8x256xf32, #tpu.memory_space<vmem>>, vector<8x256xf32>
      %14 = arith.addf %13, %3 : vector<8x256xf32>
      %c0_10 = arith.constant 0 : index
      %c0_11 = arith.constant 0 : index
      %15 = vector.load %arg7[%c0_10, %c0_11] : memref<8x256xf32, #tpu.memory_space<vmem>>, vector<8x256xf32>
      tpu.vector_store %arg7[%c0_10, %c0_11], %14 {strides = array<i32>} : memref<8x256xf32, #tpu.memory_space<vmem>>, vector<8x256xf32>,
    } else {
    }
    %c0_i32_6 = arith.constant 0 : i32
    %10 = arith.cmpi eq, %arg2, %c0_i32_6 : i32
    %11 = arith.extui %10 : i1 to i32
    %c0_i32_7 = arith.constant 0 : i32
    %12 = arith.cmpi ne, %11, %c0_i32_7 : i32
    scf.if %12 {
      %c0_8 = arith.constant 0 : index
      %c0_9 = arith.constant 0 : index
      %13 = vector.load %arg7[%c0_8, %c0_9] : memref<8x256xf32, #tpu.memory_space<vmem>>, vector<8x256xf32>
      %c0_10 = arith.constant 0 : index
      %c0_11 = arith.constant 0 : index
      %14 = vector.load %arg6[%c0_10, %c0_11] : memref<8x256xf32, #tpu.memory_space<vmem>>, vector<8x256xf32>
      tpu.vector_store %arg6[%c0_10, %c0_11], %13 {strides = array<i32>} : memref<8x256xf32, #tpu.memory_space<vmem>>, vector<8x256xf32>,
    } else {
    }
    return
  }
  func.func @transform_0(%arg0: i32, %arg1: i32, %arg2: i32) -> (i32, i32) {
    %c0_i32 = arith.constant 0 : i32
    return %arg0, %arg2 : i32, i32
  }
  func.func @transform_1(%arg0: i32, %arg1: i32, %arg2: i32) -> (i32, i32) {
    %c0_i32 = arith.constant 0 : i32
    return %arg2, %arg1 : i32, i32
  }
  func.func @transform_2(%arg0: i32, %arg1: i32, %arg2: i32) -> (i32, i32) {
    %c0_i32 = arith.constant 0 : i32
    %c0_i32_0 = arith.constant 0 : i32
    return %c0_i32, %arg1 : i32, i32
  }
  func.func @transform_3(%arg0: i32, %arg1: i32, %arg2: i32) -> (i32, i32) {
    %c0_i32 = arith.constant 0 : i32
    return %arg0, %arg1 : i32, i32
  }
}

</mosaic_0001>

<llo_original>
// kernel: tpu_custom_call.1
$region0: #{tpu_custom_call.1}
  #allocation0 [shape = 'u32[]', space=smem, size = 0x4, offset = 0x4, fixed_abs, tag = 'smem constant byte address 0x4 - core index']
  #allocation1 [shape = 'u32[72,128]{1,0:T(1,128)}', space=vmem, size = 0x9000, scoped, tag = 'internal scratch']
  #allocation2 [shape = 'f32[8,256]{1,0:T(8,128)}', space=vmem, size = 0x2000, scoped, tag = 'scratch operand']
  %s0 = inlined_call_operand.hbm [shape: f32[8,128], index: 0, kind: input, shape index: {}]
  %s1 = inlined_call_operand.hbm [shape: bf16[128,256], index: 1, kind: input, shape index: {}]
  %s2 = inlined_call_operand.hbm [shape: f32[1,256], index: 2, kind: input, shape index: {}]
  %s3 = inlined_call_operand.hbm [shape: f32[8,256], index: 3, kind: output, shape index: {}]
  %s4 = sld [smem:[#allocation0]]
  $region46: #{tpu_custom_call.1} parent=0
    _
  %s6 = ssub.s32 1, %s4
  %s7 = scalar_select 0, %s6, %s4
  $region1: #{tpu_custom_call.1} parent=0
    #allocation3 [shape = 'u8[4096]{0}', space=vmem, size = 0x1000, scoped, tag = 'input window, operand 0, single buffered']
    #allocation4 [shape = 's32[1]{0}', space=sflag, size = 0x4, scoped, tag = 'scoped memory for tpu_custom_call.1']
    #allocation5 [shape = 's32[1]{0}', space=sflag, size = 0x4, scoped, tag = 'scoped memory for tpu_custom_call.1']
    #allocation6 [shape = 'u8[65536]{0}', space=vmem, size = 0x10000, scoped, tag = 'input window, operand 1, single buffered']
    #allocation7 [shape = 's32[1]{0}', space=sflag, size = 0x4, scoped, tag = 'scoped memory for tpu_custom_call.1']
    #allocation8 [shape = 'u8[1024]{0}', space=vmem, size = 0x400, scoped, tag = 'input window, operand 2, single buffered']
    #allocation9 [shape = 'u8[8192]{0}', space=vmem, size = 0x2000, scoped, tag = 'output window, operand 0, single buffered']
    %8 = vsyncpa [#allocation4], 0
    %9 = vsyncpa [#allocation7], 0
    %10 = vsyncpa [#allocation5], 0
    // Predicated region
    $region2: #{tpu_custom_call.1} parent=1 // pred_check
      _
    $region3: #{tpu_custom_call.1} parent=1 // pred_check_branch
      %12 = sbr.rel (0) target = $region5
    $region4: #{tpu_custom_call.1} parent=1 // pred_region
      %14 = vsyncadd [#allocation4], 0
      %s16 = sshll.u32 %s0, 4
      %s17 = int_to_ptr.hbm [resolvable:$true] %s16
      %s18 = sshll.u32 [#allocation3], 4
      %s19 = int_to_ptr.vmem [resolvable:$true] %s18
      %21 = dma.hbm_to_vmem [thread:$0]  %s17, 128, %s19, [#allocation4]
    $region5: #{tpu_custom_call.1} parent=1 // pred_fallthru
      _
    // Predicated region
    $region6: #{tpu_custom_call.1} parent=1 // pred_check
      _
    $region7: #{tpu_custom_call.1} parent=1 // pred_check_branch
      %23 = sbr.rel (0) target = $region9
    $region8: #{tpu_custom_call.1} parent=1 // pred_region
      %25 = vsyncadd [#allocation7], 0
      %s26 = sshll.u32 %s1, 4
      %s27 = int_to_ptr.hbm [resolvable:$true] %s26
      %s28 = sshll.u32 [#allocation6], 4
      %s29 = int_to_ptr.vmem [resolvable:$true] %s28
      %34 = dma.hbm_to_vmem [thread:$0]  %s27, 2048, %s29, [#allocation7], 128, 128, 8
    $region9: #{tpu_custom_call.1} parent=1 // pred_fallthru
      _
    // Predicated region
    $region10: #{tpu_custom_call.1} parent=1 // pred_check
      _
    $region11: #{tpu_custom_call.1} parent=1 // pred_check_branch
      %36 = sbr.rel (0) target = $region13
    $region12: #{tpu_custom_call.1} parent=1 // pred_region
      %38 = vsyncadd [#allocation7], 0
      %s40 = sshll.u32 %s2, 4
      %s41 = int_to_ptr.hbm [resolvable:$true] %s40
      %s42 = sshll.u32 [#allocation8], 4
      %s43 = int_to_ptr.vmem [resolvable:$true] %s42
      %45 = dma.hbm_to_vmem [thread:$0]  %s41, 32, %s43, [#allocation7]
    $region13: #{tpu_custom_call.1} parent=1 // pred_fallthru
      _
    // Predicated region
    $region14: #{tpu_custom_call.1} parent=1 // pred_check
      _
    $region15: #{tpu_custom_call.1} parent=1 // pred_check_branch
      %47 = sbr.rel (0) target = $region17
    $region16: #{tpu_custom_call.1} parent=1 // pred_region
      %49 = dma.done [#allocation4], 128
    $region17: #{tpu_custom_call.1} parent=1 // pred_fallthru
      _
    // Predicated region
    $region18: #{tpu_custom_call.1} parent=1 // pred_check
      _
    $region19: #{tpu_custom_call.1} parent=1 // pred_check_branch
      %51 = sbr.rel (0) target = $region21
    $region20: #{tpu_custom_call.1} parent=1 // pred_region
      %53 = dma.done [#allocation7], 2048
    $region21: #{tpu_custom_call.1} parent=1 // pred_fallthru
      _
    // Predicated region
    $region22: #{tpu_custom_call.1} parent=1 // pred_check
      _
    $region23: #{tpu_custom_call.1} parent=1 // pred_check_branch
      %55 = sbr.rel (0) target = $region25
    $region24: #{tpu_custom_call.1} parent=1 // pred_region
      %57 = dma.done [#allocation7], 32
    $region25: #{tpu_custom_call.1} parent=1 // pred_fallthru
      _
    %v58 = vld [vmem:[#allocation3] sm:$0xff]
    %v59 = vpack.c.bf16 %v58, %v58
    %v60 = vld [vmem:[#allocation6] sm:$0xff]
    %v61 = vld [vmem:[#allocation6 + $0x8] sm:$0xff]
    %v62 = vld [vmem:[#allocation6 + $0x10] sm:$0xff]
    %v63 = vld [vmem:[#allocation6 + $0x18] sm:$0xff]
    %v64 = vld [vmem:[#allocation6 + $0x20] sm:$0xff]
    %v65 = vld [vmem:[#allocation6 + $0x28] sm:$0xff]
    %v66 = vld [vmem:[#allocation6 + $0x30] sm:$0xff]
    %v67 = vld [vmem:[#allocation6 + $0x38] sm:$0xff]
    %v68 = vld [vmem:[#allocation6 + $0x40] sm:$0xff]
    %v69 = vld [vmem:[#allocation6 + $0x48] sm:$0xff]
    %v70 = vld [vmem:[#allocation6 + $0x50] sm:$0xff]
    %v71 = vld [vmem:[#allocation6 + $0x58] sm:$0xff]
    %v72 = vld [vmem:[#allocation6 + $0x60] sm:$0xff]
    %v73 = vld [vmem:[#allocation6 + $0x68] sm:$0xff]
    %v74 = vld [vmem:[#allocation6 + $0x70] sm:$0xff]
    %v75 = vld [vmem:[#allocation6 + $0x78] sm:$0xff]
    %v92 = vunpack.c.l.b16 %v60
    %v93 = vunpack.c.h.b16 %v60
    %v94 = vunpack.c.l.b16 %v61
    %v95 = vunpack.c.h.b16 %v61
    %v96 = vunpack.c.l.b16 %v62
    %v97 = vunpack.c.h.b16 %v62
    %v98 = vunpack.c.l.b16 %v63
    %v99 = vunpack.c.h.b16 %v63
    %v100 = vunpack.c.l.b16 %v64
    %v101 = vunpack.c.h.b16 %v64
    %v102 = vunpack.c.l.b16 %v65
    %v103 = vunpack.c.h.b16 %v65
    %v104 = vunpack.c.l.b16 %v66
    %v105 = vunpack.c.h.b16 %v66
    %v106 = vunpack.c.l.b16 %v67
    %v107 = vunpack.c.h.b16 %v67
    %v108 = vunpack.c.l.b16 %v68
    %v109 = vunpack.c.h.b16 %v68
    %v110 = vunpack.c.l.b16 %v69
    %v111 = vunpack.c.h.b16 %v69
    %v112 = vunpack.c.l.b16 %v70
    %v113 = vunpack.c.h.b16 %v70
    %v114 = vunpack.c.l.b16 %v71
    %v115 = vunpack.c.h.b16 %v71
    %v116 = vunpack.c.l.b16 %v72
    %v117 = vunpack.c.h.b16 %v72
    %v118 = vunpack.c.l.b16 %v73
    %v119 = vunpack.c.h.b16 %v73
    %v120 = vunpack.c.l.b16 %v74
    %v121 = vunpack.c.h.b16 %v74
    %v122 = vunpack.c.l.b16 %v75
    %v123 = vunpack.c.h.b16 %v75
    %v124 = vpack.c.b16 %v94, %v92
    %v125 = vpack.c.b16 %v95, %v93
    %v126 = vpack.c.b16 %v98, %v96
    %v127 = vpack.c.b16 %v99, %v97
    %v128 = vpack.c.b16 %v102, %v100
    %v129 = vpack.c.b16 %v103, %v101
    %v130 = vpack.c.b16 %v106, %v104
    %v131 = vpack.c.b16 %v107, %v105
    %v132 = vpack.c.b16 %v110, %v108
    %v133 = vpack.c.b16 %v111, %v109
    %v134 = vpack.c.b16 %v114, %v112
    %v135 = vpack.c.b16 %v115, %v113
    %v136 = vpack.c.b16 %v118, %v116
    %v137 = vpack.c.b16 %v119, %v117
    %v138 = vpack.c.b16 %v122, %v120
    %v139 = vpack.c.b16 %v123, %v121
    %156 = vmatpush.bf16.msra.mxu0 %v138
    %157 = vmatpush.bf16.msra.mxu0 %v136
    %158 = vmatpush.bf16.msra.mxu0 %v134
    %159 = vmatpush.bf16.msra.mxu0 %v132
    %160 = vmatpush.bf16.msra.mxu0 %v130
    %161 = vmatpush.bf16.msra.mxu0 %v128
    %162 = vmatpush.bf16.msra.mxu0 %v126
    %163 = vmatpush.bf16.msra.mxu0 %v124
    %164 = vmatmul.bf16.gmra.mxu0 %v59
    %v165 = vpop.f32.mrf.mxu0
    %v166 = vadd.f32 0.0, %v165
    %v167 = vpop.f32.mrf.mxu0
    %168 = vdwg.mxu0
    %169 = vmatpush.bf16.msra.mxu0 %v139
    %170 = vmatpush.bf16.msra.mxu0 %v137
    %171 = vmatpush.bf16.msra.mxu0 %v135
    %172 = vmatpush.bf16.msra.mxu0 %v133
    %173 = vmatpush.bf16.msra.mxu0 %v131
    %174 = vmatpush.bf16.msra.mxu0 %v129
    %175 = vmatpush.bf16.msra.mxu0 %v127
    %176 = vmatpush.bf16.msra.mxu0 %v125
    %177 = vmatmul.bf16.gmra.mxu0 %v59
    %v178 = vpop.f32.mrf.mxu0
    %v179 = vadd.f32 0.0, %v178
    %v180 = vpop.f32.mrf.mxu0
    %181 = vdwg.mxu0
    %p182 = scmp.eq.s32.totalorder 0, 0
    // Predicated region
    $region26: #{tpu_custom_call.1} parent=1 // pred_check
      %p183 = pneg %p182
    $region27: #{tpu_custom_call.1} parent=1 // pred_check_branch
      %185 = sbr.rel (%p183) target = $region29
    $region28: #{tpu_custom_call.1} parent=1 // pred_region
      %v186 = vld [vmem:[#allocation8] sm:$0x3]
      %v188 = vperm.slane %v186, 0
      %v189 = vperm.slane %v186, 1
      %v192 = vadd.f32 %v166, %v188
      %v193 = vadd.f32 %v179, %v189
      %194 = vst [vmem:[#allocation2] sm:$0xff] %v192
      %195 = vst [vmem:[#allocation2 + $0x8] sm:$0xff] %v193
    $region29: #{tpu_custom_call.1} parent=1 // pred_fallthru
      _
    %p196 = scmp.ne.s32.totalorder 0, 0
    // Predicated region
    $region30: #{tpu_custom_call.1} parent=1 // pred_check
      %p197 = pneg %p196
    $region31: #{tpu_custom_call.1} parent=1 // pred_check_branch
      %199 = sbr.rel (%p197) target = $region33
    $region32: #{tpu_custom_call.1} parent=1 // pred_region
      %v200 = vld [vmem:[#allocation2] sm:$0xff]
      %v201 = vld [vmem:[#allocation2 + $0x8] sm:$0xff]
      %v202 = vadd.f32 %v200, %v166
      %v203 = vadd.f32 %v201, %v179
      %204 = vst [vmem:[#allocation2] sm:$0xff] %v202
      %205 = vst [vmem:[#allocation2 + $0x8] sm:$0xff] %v203
    $region33: #{tpu_custom_call.1} parent=1 // pred_fallthru
      _
    // Predicated region
    $region34: #{tpu_custom_call.1} parent=1 // pred_check
      %p206 = pneg %p182
    $region35: #{tpu_custom_call.1} parent=1 // pred_check_branch
      %208 = sbr.rel (%p206) target = $region37
    $region36: #{tpu_custom_call.1} parent=1 // pred_region
      %v209 = vld [vmem:[#allocation2] sm:$0xff]
      %v210 = vld [vmem:[#allocation2 + $0x8] sm:$0xff]
      %211 = vst [vmem:[#allocation9] sm:$0xff] %v209
      %212 = vst [vmem:[#allocation9 + $0x8] sm:$0xff] %v210
    $region37: #{tpu_custom_call.1} parent=1 // pred_fallthru
      _
    // Predicated region
    $region38: #{tpu_custom_call.1} parent=1 // pred_check
      _
    $region39: #{tpu_custom_call.1} parent=1 // pred_check_branch
      %214 = sbr.rel (0) target = $region41
    $region40: #{tpu_custom_call.1} parent=1 // pred_region
      %216 = vsyncadd [#allocation5], 0
      %s218 = sshll.u32 [#allocation9], 4
      %s219 = int_to_ptr.vmem [resolvable:$true] %s218
      %s220 = sshll.u32 %s3, 4
      %s221 = int_to_ptr.hbm [resolvable:$true] %s220
      %223 = dma.vmem_to_hbm [thread:$0]  %s219, 256, %s221, [#allocation5]
    $region41: #{tpu_custom_call.1} parent=1 // pred_fallthru
      _
    // Predicated region
    $region42: #{tpu_custom_call.1} parent=1 // pred_check
      _
    $region43: #{tpu_custom_call.1} parent=1 // pred_check_branch
      %225 = sbr.rel (0) target = $region45
    $region44: #{tpu_custom_call.1} parent=1 // pred_region
      %227 = dma.done [#allocation5], 256
    $region45: #{tpu_custom_call.1} parent=1 // pred_fallthru
      _
    %228 = vsyncpa [#allocation4], 1
    %229 = vsyncpa [#allocation7], 1
    %230 = vsyncpa [#allocation5], 1

</llo_original>
